<compile_context>
chip_gen: v6e
topology: v6e:2x2x1
jax: 0.10.0
libtpu: 0.0.40
codegen_flags: <defaults>
</compile_context>

<pallas_src>
import math

import jax
import jax.numpy as jnp
from jax.experimental import pallas as pl
from jax.experimental.pallas import tpu as pltpu


def _sample_points(num_bins):
    # Matches torch.linspace(0, 1, steps=num_bins).
    if num_bins == 1:
        return [0.0]
    return [k / (num_bins - 1) for k in range(num_bins)]


def _make_kernel(num_bins, alfa, beta, n_tile, f_pad, use_mxu, sp_vals):
    def kernel(data_ref, attn_ref, out_ref, acc_ref, norm_ref):
        n = pl.program_id(1)

        @pl.when(n == 0)
        def _init():
            acc_ref[...] = jnp.zeros_like(acc_ref)
            norm_ref[...] = jnp.zeros_like(norm_ref)

        d = data_ref[...]                                    # (n_tile, f_pad)

        if use_mxu:
            # (1, n_tile) attention row; contraction over N runs on the MXU.
            aa_row = attn_ref[...] * alfa
        else:
            # Hoisted lane-broadcast of alfa * attention (done once, not per bin).
            aa = jnp.broadcast_to(attn_ref[...] * alfa, (n_tile, f_pad))

        rows = []
        norm_run = None
        for k in range(num_bins):                            # static unroll (num_bins small)
            spk = sp_vals[k]                                 # Python float constant
            diff = d - spk
            e = jnp.exp(beta * (diff * diff))                # EUP — the binding unit
            if use_mxu:
                row = jnp.dot(aa_row, e, preferred_element_type=jnp.float32)   # (1, f_pad)
            else:
                row = jnp.sum(aa * e, axis=0, keepdims=True)                    # (1, f_pad)
            rows.append(row)
            norm_run = row if norm_run is None else norm_run + row

        block = jnp.concatenate(rows, axis=0)                # (num_bins, f_pad)
        acc_ref[...] += block
        norm_ref[...] += norm_run

        @pl.when(n == pl.num_programs(1) - 1)
        def _finalize():
            # Exact reciprocal (approx EUP reciprocal would miss the 1e-5 check),
            # then one fused, lane-dense block store of the normalized result.
            inv = pl.reciprocal(norm_ref[...], approx=False)                    # (1, f_pad)
            out_ref[...] = acc_ref[...] * inv

    return kernel


def distribution_pooling_filter(data, attention_weights, num_bins=1, sigma=0.1):
    """JAX/Pallas equivalent of DistributionPoolingFilter.forward.

    data:              (B, N, F) float32
    attention_weights: (B, N)    float32
    returns:           (B, F, num_bins) float32
    """
    data = data.astype(jnp.float32)
    attention_weights = attention_weights.astype(jnp.float32)
    B, N, F = data.shape

    alfa = 1.0 / math.sqrt(2.0 * math.pi * sigma ** 2)
    beta = -1.0 / (2.0 * sigma ** 2)
    sp_vals = _sample_points(num_bins)

    # Lane-dense feature axis: pad F up to a multiple of 128.
    f_pad = ((F + 127) // 128) * 128

    # Tile the instance axis so the double-buffered data tile stays <= ~4 MiB
    # (comfortable under v7x's 64 MiB physical / 32 MiB scoped-default VMEM).
    max_rows = (4 * 1024 * 1024) // (4 * f_pad)
    max_rows = max(8, (max_rows // 8) * 8)
    if N <= max_rows:
        n_tile, n_pad = N, N
    else:
        n_tile = max_rows
        n_pad = ((N + n_tile - 1) // n_tile) * n_tile

    use_mxu = n_tile >= 128

    data_p = data
    if f_pad != F or n_pad != N:
        # Zero-padding is harmless: padded feature columns are sliced off, padded
        # instance rows carry zero attention weight so they contribute nothing.
        data_p = jnp.pad(data, ((0, 0), (0, n_pad - N), (0, f_pad - F)))
    attn_p = attention_weights
    if n_pad != N:
        attn_p = jnp.pad(attention_weights, ((0, 0), (0, n_pad - N)))

    if use_mxu:
        attn_in = attn_p.reshape(B, 1, n_pad)
        attn_spec = pl.BlockSpec((None, 1, n_tile), lambda b, n: (b, 0, n))
    else:
        attn_in = attn_p.reshape(B, n_pad, 1)
        attn_spec = pl.BlockSpec((None, n_tile, 1), lambda b, n: (b, n, 0))

    kernel = _make_kernel(num_bins, alfa, beta, n_tile, f_pad, use_mxu, sp_vals)

    cost = pl.CostEstimate(
        flops=5 * B * n_pad * f_pad * num_bins,
        transcendentals=B * n_pad * f_pad * num_bins,
        bytes_accessed=4 * (B * n_pad * f_pad + B * n_pad + B * num_bins * f_pad),
    )

    out_kf = pl.pallas_call(
        kernel,
        out_shape=jax.ShapeDtypeStruct((B, num_bins, f_pad), jnp.float32),
        grid_spec=pltpu.PrefetchScalarGridSpec(
            num_scalar_prefetch=0,
            grid=(B, n_pad // n_tile),
            in_specs=[
                pl.BlockSpec((None, n_tile, f_pad), lambda b, n: (b, n, 0)),
                attn_spec,
            ],
            out_specs=pl.BlockSpec((None, num_bins, f_pad), lambda b, n: (b, 0, 0)),
            scratch_shapes=[
                pltpu.VMEM((num_bins, f_pad), jnp.float32),   # per-bin accumulator
                pltpu.VMEM((1, f_pad), jnp.float32),          # running norm coeff
            ],
        ),
        compiler_params=pltpu.CompilerParams(
            dimension_semantics=("parallel", "arbitrary"),
        ),
        cost_estimate=cost,
    )(data_p, attn_in)

    out_kf = out_kf[:, :, :F]                 # drop padded feature columns
    # (B, num_bins, F) -> (B, F, num_bins) to match the PyTorch output layout
    # (kept lane-dense inside the kernel; this transpose is cheap wrapper plumbing
    # and can be fused into the consumer if it ever matters).
    return jnp.transpose(out_kf, (0, 2, 1))


def _reference(data, attention_weights, num_bins, sigma):
    """Pure-JAX reference mirroring the PyTorch forward."""
    alfa = 1.0 / math.sqrt(2.0 * math.pi * sigma ** 2)
    beta = -1.0 / (2.0 * sigma ** 2)
    sp = jnp.asarray(_sample_points(num_bins), dtype=jnp.float32)     # (K,)
    diff = sp[None, None, None, :] - data[..., None]                  # (B, N, F, K)
    result = alfa * jnp.exp(beta * diff ** 2)
    result = attention_weights[:, :, None, None] * result             # (B, N, F, K)
    out_unnorm = jnp.sum(result, axis=1)                              # (B, F, K)
    norm = jnp.sum(out_unnorm, axis=2, keepdims=True)                 # (B, F, 1)
    return out_unnorm / norm


if __name__ == "__main__":
    B, N, F = 2, 8, 32
    NUM_BINS, SIGMA = 16, 0.1

    key = jax.random.PRNGKey(0)
    k1, k2 = jax.random.split(key)
    # Instance features in [0, 1] (as they would be after a sigmoid head).
    data = jax.nn.sigmoid(jax.random.normal(k1, (B, N, F), dtype=jnp.float32))
    # Attention weights normalized over instances (softmax), strictly positive.
    attention_weights = jax.nn.softmax(
        jax.random.normal(k2, (B, N), dtype=jnp.float32), axis=1
    )

    out = distribution_pooling_filter(data, attention_weights,
                                      num_bins=NUM_BINS, sigma=SIGMA)
    out = jax.block_until_ready(out)

    ref = _reference(data, attention_weights, NUM_BINS, SIGMA)

    assert out.shape == (B, F, NUM_BINS), out.shape
    assert jnp.allclose(out, ref, atol=1e-5, rtol=1e-5), \
        f"max abs diff = {jnp.max(jnp.abs(out - ref))}"

    print("KERNEL_OK")
</pallas_src>

<mosaic_0001>
module attributes {stable_mosaic.version = 11 : i64} {
  func.func @kernel(%arg0: i32, %arg1: i32, %arg2: memref<1x8x128xf32, #tpu.memory_space<vmem>>, %arg3: memref<1x8x1xf32, #tpu.memory_space<vmem>>, %arg4: memref<1x16x128xf32, #tpu.memory_space<vmem>>, %arg5: memref<16x128xf32, #tpu.memory_space<vmem>>, %arg6: memref<1x128xf32, #tpu.memory_space<vmem>>) attributes {dimension_semantics = [#tpu.dimension_semantics<parallel>, #tpu.dimension_semantics<arbitrary>], iteration_bounds = array<i64: 2, 1>, scalar_prefetch = 0 : i64, scratch_operands = 2 : i64, tpu.core_type = #tpu.core_type<tc>, window_params = [{transform_indices = @transform_0, window_bounds = array<i64: 1, 8, 128>}, {transform_indices = @transform_1, window_bounds = array<i64: 1, 8, 1>}, {transform_indices = @transform_2, window_bounds = array<i64: 1, 16, 128>}]} {
    %c0_i32 = arith.constant 0 : i32
    %0 = arith.cmpi eq, %arg1, %c0_i32 : i32
    %1 = arith.extui %0 : i1 to i32
    %c0_i32_0 = arith.constant 0 : i32
    %2 = arith.cmpi ne, %1, %c0_i32_0 : i32
    scf.if %2 {
      %cst_64 = arith.constant 0.000000e+00 : f32
      %180 = vector.broadcast %cst_64 : f32 to vector<16x128xf32>
      %c0_65 = arith.constant 0 : index
      %c0_66 = arith.constant 0 : index
      %181 = vector.load %arg5[%c0_65, %c0_66] : memref<16x128xf32, #tpu.memory_space<vmem>>, vector<16x128xf32>
      tpu.vector_store %arg5[%c0_65, %c0_66], %180 {strides = array<i32>} : memref<16x128xf32, #tpu.memory_space<vmem>>, vector<16x128xf32>,
      %cst_67 = arith.constant 0.000000e+00 : f32
      %182 = vector.broadcast %cst_67 : f32 to vector<1x128xf32>
      %c0_68 = arith.constant 0 : index
      %c0_69 = arith.constant 0 : index
      %183 = vector.load %arg6[%c0_68, %c0_69] : memref<1x128xf32, #tpu.memory_space<vmem>>, vector<1x128xf32>
      tpu.vector_store %arg6[%c0_68, %c0_69], %182 {strides = array<i32>} : memref<1x128xf32, #tpu.memory_space<vmem>>, vector<1x128xf32>,
    } else {
    }
    %c0 = arith.constant 0 : index
    %c0_1 = arith.constant 0 : index
    %c0_2 = arith.constant 0 : index
    %3 = vector.load %arg2[%c0, %c0_1, %c0_2] : memref<1x8x128xf32, #tpu.memory_space<vmem>>, vector<1x8x128xf32>
    %4 = vector.shape_cast %3 : vector<1x8x128xf32> to vector<8x128xf32>
    %c0_3 = arith.constant 0 : index
    %c0_4 = arith.constant 0 : index
    %c0_5 = arith.constant 0 : index
    %5 = vector.load %arg3[%c0_3, %c0_4, %c0_5] : memref<1x8x1xf32, #tpu.memory_space<vmem>>, vector<1x8x1xf32>
    %6 = vector.shape_cast %5 : vector<1x8x1xf32> to vector<8x1xf32>
    %cst = arith.constant 3.9894228 : f32
    %7 = vector.broadcast %cst : f32 to vector<8x1xf32>
    %8 = arith.mulf %6, %7 : vector<8x1xf32>
    %9 = vector.shape_cast %8 : vector<8x1xf32> to vector<8x1xf32>
    %10 = vector.broadcast %9 : vector<8x1xf32> to vector<8x128xf32>
    %cst_6 = arith.constant 0.000000e+00 : f32
    %11 = vector.broadcast %cst_6 : f32 to vector<8x128xf32>
    %12 = arith.subf %4, %11 : vector<8x128xf32>
    %13 = arith.mulf %12, %12 : vector<8x128xf32>
    %cst_7 = arith.constant -5.000000e+01 : f32
    %14 = vector.broadcast %cst_7 : f32 to vector<8x128xf32>
    %15 = arith.mulf %14, %13 : vector<8x128xf32>
    %16 = math.exp %15 : vector<8x128xf32>
    %17 = arith.mulf %10, %16 : vector<8x128xf32>
    %cst_8 = arith.constant dense<0.000000e+00> : vector<128xf32>
    %18 = vector.multi_reduction <add>, %17, %cst_8 [0] : vector<8x128xf32> to vector<128xf32>
    %19 = vector.shape_cast %18 : vector<128xf32> to vector<1x128xf32>
    %cst_9 = arith.constant 0.0666666701 : f32
    %20 = vector.broadcast %cst_9 : f32 to vector<8x128xf32>
    %21 = arith.subf %4, %20 : vector<8x128xf32>
    %22 = arith.mulf %21, %21 : vector<8x128xf32>
    %cst_10 = arith.constant -5.000000e+01 : f32
    %23 = vector.broadcast %cst_10 : f32 to vector<8x128xf32>
    %24 = arith.mulf %23, %22 : vector<8x128xf32>
    %25 = math.exp %24 : vector<8x128xf32>
    %26 = arith.mulf %10, %25 : vector<8x128xf32>
    %cst_11 = arith.constant dense<0.000000e+00> : vector<128xf32>
    %27 = vector.multi_reduction <add>, %26, %cst_11 [0] : vector<8x128xf32> to vector<128xf32>
    %28 = vector.shape_cast %27 : vector<128xf32> to vector<1x128xf32>
    %29 = arith.addf %19, %28 : vector<1x128xf32>
    %cst_12 = arith.constant 0.13333334 : f32
    %30 = vector.broadcast %cst_12 : f32 to vector<8x128xf32>
    %31 = arith.subf %4, %30 : vector<8x128xf32>
    %32 = arith.mulf %31, %31 : vector<8x128xf32>
    %cst_13 = arith.constant -5.000000e+01 : f32
    %33 = vector.broadcast %cst_13 : f32 to vector<8x128xf32>
    %34 = arith.mulf %33, %32 : vector<8x128xf32>
    %35 = math.exp %34 : vector<8x128xf32>
    %36 = arith.mulf %10, %35 : vector<8x128xf32>
    %cst_14 = arith.constant dense<0.000000e+00> : vector<128xf32>
    %37 = vector.multi_reduction <add>, %36, %cst_14 [0] : vector<8x128xf32> to vector<128xf32>
    %38 = vector.shape_cast %37 : vector<128xf32> to vector<1x128xf32>
    %39 = arith.addf %29, %38 : vector<1x128xf32>
    %cst_15 = arith.constant 2.000000e-01 : f32
    %40 = vector.broadcast %cst_15 : f32 to vector<8x128xf32>
    %41 = arith.subf %4, %40 : vector<8x128xf32>
    %42 = arith.mulf %41, %41 : vector<8x128xf32>
    %cst_16 = arith.constant -5.000000e+01 : f32
    %43 = vector.broadcast %cst_16 : f32 to vector<8x128xf32>
    %44 = arith.mulf %43, %42 : vector<8x128xf32>
    %45 = math.exp %44 : vector<8x128xf32>
    %46 = arith.mulf %10, %45 : vector<8x128xf32>
    %cst_17 = arith.constant dense<0.000000e+00> : vector<128xf32>
    %47 = vector.multi_reduction <add>, %46, %cst_17 [0] : vector<8x128xf32> to vector<128xf32>
    %48 = vector.shape_cast %47 : vector<128xf32> to vector<1x128xf32>
    %49 = arith.addf %39, %48 : vector<1x128xf32>
    %cst_18 = arith.constant 0.266666681 : f32
    %50 = vector.broadcast %cst_18 : f32 to vector<8x128xf32>
    %51 = arith.subf %4, %50 : vector<8x128xf32>
    %52 = arith.mulf %51, %51 : vector<8x128xf32>
    %cst_19 = arith.constant -5.000000e+01 : f32
    %53 = vector.broadcast %cst_19 : f32 to vector<8x128xf32>
    %54 = arith.mulf %53, %52 : vector<8x128xf32>
    %55 = math.exp %54 : vector<8x128xf32>
    %56 = arith.mulf %10, %55 : vector<8x128xf32>
    %cst_20 = arith.constant dense<0.000000e+00> : vector<128xf32>
    %57 = vector.multi_reduction <add>, %56, %cst_20 [0] : vector<8x128xf32> to vector<128xf32>
    %58 = vector.shape_cast %57 : vector<128xf32> to vector<1x128xf32>
    %59 = arith.addf %49, %58 : vector<1x128xf32>
    %cst_21 = arith.constant 0.333333343 : f32
    %60 = vector.broadcast %cst_21 : f32 to vector<8x128xf32>
    %61 = arith.subf %4, %60 : vector<8x128xf32>
    %62 = arith.mulf %61, %61 : vector<8x128xf32>
    %cst_22 = arith.constant -5.000000e+01 : f32
    %63 = vector.broadcast %cst_22 : f32 to vector<8x128xf32>
    %64 = arith.mulf %63, %62 : vector<8x128xf32>
    %65 = math.exp %64 : vector<8x128xf32>
    %66 = arith.mulf %10, %65 : vector<8x128xf32>
    %cst_23 = arith.constant dense<0.000000e+00> : vector<128xf32>
    %67 = vector.multi_reduction <add>, %66, %cst_23 [0] : vector<8x128xf32> to vector<128xf32>
    %68 = vector.shape_cast %67 : vector<128xf32> to vector<1x128xf32>
    %69 = arith.addf %59, %68 : vector<1x128xf32>
    %cst_24 = arith.constant 4.000000e-01 : f32
    %70 = vector.broadcast %cst_24 : f32 to vector<8x128xf32>
    %71 = arith.subf %4, %70 : vector<8x128xf32>
    %72 = arith.mulf %71, %71 : vector<8x128xf32>
    %cst_25 = arith.constant -5.000000e+01 : f32
    %73 = vector.broadcast %cst_25 : f32 to vector<8x128xf32>
    %74 = arith.mulf %73, %72 : vector<8x128xf32>
    %75 = math.exp %74 : vector<8x128xf32>
    %76 = arith.mulf %10, %75 : vector<8x128xf32>
    %cst_26 = arith.constant dense<0.000000e+00> : vector<128xf32>
    %77 = vector.multi_reduction <add>, %76, %cst_26 [0] : vector<8x128xf32> to vector<128xf32>
    %78 = vector.shape_cast %77 : vector<128xf32> to vector<1x128xf32>
    %79 = arith.addf %69, %78 : vector<1x128xf32>
    %cst_27 = arith.constant 0.466666669 : f32
    %80 = vector.broadcast %cst_27 : f32 to vector<8x128xf32>
    %81 = arith.subf %4, %80 : vector<8x128xf32>
    %82 = arith.mulf %81, %81 : vector<8x128xf32>
    %cst_28 = arith.constant -5.000000e+01 : f32
    %83 = vector.broadcast %cst_28 : f32 to vector<8x128xf32>
    %84 = arith.mulf %83, %82 : vector<8x128xf32>
    %85 = math.exp %84 : vector<8x128xf32>
    %86 = arith.mulf %10, %85 : vector<8x128xf32>
    %cst_29 = arith.constant dense<0.000000e+00> : vector<128xf32>
    %87 = vector.multi_reduction <add>, %86, %cst_29 [0] : vector<8x128xf32> to vector<128xf32>
    %88 = vector.shape_cast %87 : vector<128xf32> to vector<1x128xf32>
    %89 = arith.addf %79, %88 : vector<1x128xf32>
    %cst_30 = arith.constant 0.533333361 : f32
    %90 = vector.broadcast %cst_30 : f32 to vector<8x128xf32>
    %91 = arith.subf %4, %90 : vector<8x128xf32>
    %92 = arith.mulf %91, %91 : vector<8x128xf32>
    %cst_31 = arith.constant -5.000000e+01 : f32
    %93 = vector.broadcast %cst_31 : f32 to vector<8x128xf32>
    %94 = arith.mulf %93, %92 : vector<8x128xf32>
    %95 = math.exp %94 : vector<8x128xf32>
    %96 = arith.mulf %10, %95 : vector<8x128xf32>
    %cst_32 = arith.constant dense<0.000000e+00> : vector<128xf32>
    %97 = vector.multi_reduction <add>, %96, %cst_32 [0] : vector<8x128xf32> to vector<128xf32>
    %98 = vector.shape_cast %97 : vector<128xf32> to vector<1x128xf32>
    %99 = arith.addf %89, %98 : vector<1x128xf32>
    %cst_33 = arith.constant 6.000000e-01 : f32
    %100 = vector.broadcast %cst_33 : f32 to vector<8x128xf32>
    %101 = arith.subf %4, %100 : vector<8x128xf32>
    %102 = arith.mulf %101, %101 : vector<8x128xf32>
    %cst_34 = arith.constant -5.000000e+01 : f32
    %103 = vector.broadcast %cst_34 : f32 to vector<8x128xf32>
    %104 = arith.mulf %103, %102 : vector<8x128xf32>
    %105 = math.exp %104 : vector<8x128xf32>
    %106 = arith.mulf %10, %105 : vector<8x128xf32>
    %cst_35 = arith.constant dense<0.000000e+00> : vector<128xf32>
    %107 = vector.multi_reduction <add>, %106, %cst_35 [0] : vector<8x128xf32> to vector<128xf32>
    %108 = vector.shape_cast %107 : vector<128xf32> to vector<1x128xf32>
    %109 = arith.addf %99, %108 : vector<1x128xf32>
    %cst_36 = arith.constant 0.666666686 : f32
    %110 = vector.broadcast %cst_36 : f32 to vector<8x128xf32>
    %111 = arith.subf %4, %110 : vector<8x128xf32>
    %112 = arith.mulf %111, %111 : vector<8x128xf32>
    %cst_37 = arith.constant -5.000000e+01 : f32
    %113 = vector.broadcast %cst_37 : f32 to vector<8x128xf32>
    %114 = arith.mulf %113, %112 : vector<8x128xf32>
    %115 = math.exp %114 : vector<8x128xf32>
    %116 = arith.mulf %10, %115 : vector<8x128xf32>
    %cst_38 = arith.constant dense<0.000000e+00> : vector<128xf32>
    %117 = vector.multi_reduction <add>, %116, %cst_38 [0] : vector<8x128xf32> to vector<128xf32>
    %118 = vector.shape_cast %117 : vector<128xf32> to vector<1x128xf32>
    %119 = arith.addf %109, %118 : vector<1x128xf32>
    %cst_39 = arith.constant 0.733333349 : f32
    %120 = vector.broadcast %cst_39 : f32 to vector<8x128xf32>
    %121 = arith.subf %4, %120 : vector<8x128xf32>
    %122 = arith.mulf %121, %121 : vector<8x128xf32>
    %cst_40 = arith.constant -5.000000e+01 : f32
    %123 = vector.broadcast %cst_40 : f32 to vector<8x128xf32>
    %124 = arith.mulf %123, %122 : vector<8x128xf32>
    %125 = math.exp %124 : vector<8x128xf32>
    %126 = arith.mulf %10, %125 : vector<8x128xf32>
    %cst_41 = arith.constant dense<0.000000e+00> : vector<128xf32>
    %127 = vector.multi_reduction <add>, %126, %cst_41 [0] : vector<8x128xf32> to vector<128xf32>
    %128 = vector.shape_cast %127 : vector<128xf32> to vector<1x128xf32>
    %129 = arith.addf %119, %128 : vector<1x128xf32>
    %cst_42 = arith.constant 8.000000e-01 : f32
    %130 = vector.broadcast %cst_42 : f32 to vector<8x128xf32>
    %131 = arith.subf %4, %130 : vector<8x128xf32>
    %132 = arith.mulf %131, %131 : vector<8x128xf32>
    %cst_43 = arith.constant -5.000000e+01 : f32
    %133 = vector.broadcast %cst_43 : f32 to vector<8x128xf32>
    %134 = arith.mulf %133, %132 : vector<8x128xf32>
    %135 = math.exp %134 : vector<8x128xf32>
    %136 = arith.mulf %10, %135 : vector<8x128xf32>
    %cst_44 = arith.constant dense<0.000000e+00> : vector<128xf32>
    %137 = vector.multi_reduction <add>, %136, %cst_44 [0] : vector<8x128xf32> to vector<128xf32>
    %138 = vector.shape_cast %137 : vector<128xf32> to vector<1x128xf32>
    %139 = arith.addf %129, %138 : vector<1x128xf32>
    %cst_45 = arith.constant 0.866666674 : f32
    %140 = vector.broadcast %cst_45 : f32 to vector<8x128xf32>
    %141 = arith.subf %4, %140 : vector<8x128xf32>
    %142 = arith.mulf %141, %141 : vector<8x128xf32>
    %cst_46 = arith.constant -5.000000e+01 : f32
    %143 = vector.broadcast %cst_46 : f32 to vector<8x128xf32>
    %144 = arith.mulf %143, %142 : vector<8x128xf32>
    %145 = math.exp %144 : vector<8x128xf32>
    %146 = arith.mulf %10, %145 : vector<8x128xf32>
    %cst_47 = arith.constant dense<0.000000e+00> : vector<128xf32>
    %147 = vector.multi_reduction <add>, %146, %cst_47 [0] : vector<8x128xf32> to vector<128xf32>
    %148 = vector.shape_cast %147 : vector<128xf32> to vector<1x128xf32>
    %149 = arith.addf %139, %148 : vector<1x128xf32>
    %cst_48 = arith.constant 0.933333337 : f32
    %150 = vector.broadcast %cst_48 : f32 to vector<8x128xf32>
    %151 = arith.subf %4, %150 : vector<8x128xf32>
    %152 = arith.mulf %151, %151 : vector<8x128xf32>
    %cst_49 = arith.constant -5.000000e+01 : f32
    %153 = vector.broadcast %cst_49 : f32 to vector<8x128xf32>
    %154 = arith.mulf %153, %152 : vector<8x128xf32>
    %155 = math.exp %154 : vector<8x128xf32>
    %156 = arith.mulf %10, %155 : vector<8x128xf32>
    %cst_50 = arith.constant dense<0.000000e+00> : vector<128xf32>
    %157 = vector.multi_reduction <add>, %156, %cst_50 [0] : vector<8x128xf32> to vector<128xf32>
    %158 = vector.shape_cast %157 : vector<128xf32> to vector<1x128xf32>
    %159 = arith.addf %149, %158 : vector<1x128xf32>
    %cst_51 = arith.constant 1.000000e+00 : f32
    %160 = vector.broadcast %cst_51 : f32 to vector<8x128xf32>
    %161 = arith.subf %4, %160 : vector<8x128xf32>
    %162 = arith.mulf %161, %161 : vector<8x128xf32>
    %cst_52 = arith.constant -5.000000e+01 : f32
    %163 = vector.broadcast %cst_52 : f32 to vector<8x128xf32>
    %164 = arith.mulf %163, %162 : vector<8x128xf32>
    %165 = math.exp %164 : vector<8x128xf32>
    %166 = arith.mulf %10, %165 : vector<8x128xf32>
    %cst_53 = arith.constant dense<0.000000e+00> : vector<128xf32>
    %167 = vector.multi_reduction <add>, %166, %cst_53 [0] : vector<8x128xf32> to vector<128xf32>
    %168 = vector.shape_cast %167 : vector<128xf32> to vector<1x128xf32>
    %169 = arith.addf %159, %168 : vector<1x128xf32>
    %170 = tpu.concatenate %19, %28, %38, %48, %58, %68, %78, %88, %98, %108, %118, %128, %138, %148, %158, %168 in 0 : vector<1x128xf32>, vector<1x128xf32>, vector<1x128xf32>, vector<1x128xf32>, vector<1x128xf32>, vector<1x128xf32>, vector<1x128xf32>, vector<1x128xf32>, vector<1x128xf32>, vector<1x128xf32>, vector<1x128xf32>, vector<1x128xf32>, vector<1x128xf32>, vector<1x128xf32>, vector<1x128xf32>, vector<1x128xf32> -> vector<16x128xf32>
    %c0_54 = arith.constant 0 : index
    %c0_55 = arith.constant 0 : index
    %171 = vector.load %arg5[%c0_54, %c0_55] : memref<16x128xf32, #tpu.memory_space<vmem>>, vector<16x128xf32>
    %172 = arith.addf %171, %170 : vector<16x128xf32>
    %c0_56 = arith.constant 0 : index
    %c0_57 = arith.constant 0 : index
    %173 = vector.load %arg5[%c0_56, %c0_57] : memref<16x128xf32, #tpu.memory_space<vmem>>, vector<16x128xf32>
    tpu.vector_store %arg5[%c0_56, %c0_57], %172 {strides = array<i32>} : memref<16x128xf32, #tpu.memory_space<vmem>>, vector<16x128xf32>,
    %c0_58 = arith.constant 0 : index
    %c0_59 = arith.constant 0 : index
    %174 = vector.load %arg6[%c0_58, %c0_59] : memref<1x128xf32, #tpu.memory_space<vmem>>, vector<1x128xf32>
    %175 = arith.addf %174, %169 : vector<1x128xf32>
    %c0_60 = arith.constant 0 : index
    %c0_61 = arith.constant 0 : index
    %176 = vector.load %arg6[%c0_60, %c0_61] : memref<1x128xf32, #tpu.memory_space<vmem>>, vector<1x128xf32>
    tpu.vector_store %arg6[%c0_60, %c0_61], %175 {strides = array<i32>} : memref<1x128xf32, #tpu.memory_space<vmem>>, vector<1x128xf32>,
    %c0_i32_62 = arith.constant 0 : i32
    %177 = arith.cmpi eq, %arg1, %c0_i32_62 : i32
    %178 = arith.extui %177 : i1 to i32
    %c0_i32_63 = arith.constant 0 : i32
    %179 = arith.cmpi ne, %178, %c0_i32_63 : i32
    scf.if %179 {
      %c0_64 = arith.constant 0 : index
      %c0_65 = arith.constant 0 : index
      %180 = vector.load %arg6[%c0_64, %c0_65] : memref<1x128xf32, #tpu.memory_space<vmem>>, vector<1x128xf32>
      %181 = tpu.reciprocal %180 : vector<1x128xf32> -> vector<1x128xf32>
      %c0_66 = arith.constant 0 : index
      %c0_67 = arith.constant 0 : index
      %182 = vector.load %arg5[%c0_66, %c0_67] : memref<16x128xf32, #tpu.memory_space<vmem>>, vector<16x128xf32>
      %183 = vector.broadcast %181 : vector<1x128xf32> to vector<16x128xf32>
      %184 = arith.mulf %182, %183 : vector<16x128xf32>
      %c0_68 = arith.constant 0 : index
      %c0_69 = arith.constant 0 : index
      %c0_70 = arith.constant 0 : index
      %185 = vector.load %arg4[%c0_68, %c0_69, %c0_70] : memref<1x16x128xf32, #tpu.memory_space<vmem>>, vector<1x16x128xf32>
      %186 = vector.shape_cast %185 : vector<1x16x128xf32> to vector<16x128xf32>
      %187 = vector.shape_cast %184 : vector<16x128xf32> to vector<1x16x128xf32>
      tpu.vector_store %arg4[%c0_68, %c0_69, %c0_70], %187 {strides = array<i32>} : memref<1x16x128xf32, #tpu.memory_space<vmem>>, vector<1x16x128xf32>,
    } else {
    }
    return
  }
  func.func @transform_0(%arg0: i32, %arg1: i32) -> (i32, i32, i32) {
    %c0_i32 = arith.constant 0 : i32
    %c0_i32_0 = arith.constant 0 : i32
    return %arg0, %arg1, %c0_i32 : i32, i32, i32
  }
  func.func @transform_1(%arg0: i32, %arg1: i32) -> (i32, i32, i32) {
    %c0_i32 = arith.constant 0 : i32
    %c0_i32_0 = arith.constant 0 : i32
    return %arg0, %arg1, %c0_i32 : i32, i32, i32
  }
  func.func @transform_2(%arg0: i32, %arg1: i32) -> (i32, i32, i32) {
    %c0_i32 = arith.constant 0 : i32
    %c0_i32_0 = arith.constant 0 : i32
    %c0_i32_1 = arith.constant 0 : i32
    return %arg0, %c0_i32, %c0_i32_0 : i32, i32, i32
  }
}

</mosaic_0001>

<llo_original>
// kernel: tpu_custom_call.1
$region0: #{tpu_custom_call.1}
  #allocation0 [shape = 'u32[]', space=smem, size = 0x4, offset = 0x4, fixed_abs, tag = 'smem constant byte address 0x4 - core index']
  #allocation1 [shape = 'u32[144,128]{1,0:T(1,128)}', space=vmem, size = 0x12000, scoped, tag = 'internal scratch']
  #allocation2 [shape = 'f32[16,128]{1,0:T(8,128)}', space=vmem, size = 0x2000, scoped, tag = 'scratch operand']
  #allocation3 [shape = 'f32[1,128]{1,0:T(1,128)}', space=vmem, size = 0x200, scoped, tag = 'scratch operand']
  %s0 = inlined_call_operand.vmem [shape: f32[2,8,128], index: 0, kind: input, shape index: {}]
  %s1 = inlined_call_operand.vmem [shape: f32[2,8,1], index: 1, kind: input, shape index: {}]
  %s2 = inlined_call_operand.hbm [shape: f32[2,16,128], index: 2, kind: output, shape index: {}]
  %s3 = sld [smem:[#allocation0]]
  $region49: #{tpu_custom_call.1} parent=0
    _
  %s5 = ssub.s32 1, %s3
  %s6 = scalar_select 0, %s5, %s3
  $region1: #{tpu_custom_call.1} parent=0
    #allocation4 [shape = 'u8[16384]{0}', space=vmem, size = 0x4000, scoped, tag = 'output window, operand 0']
    #allocation5 [shape = 's32[2]{0}', space=sflag, size = 0x8, scoped, tag = 'scoped memory for tpu_custom_call.1']
    %7 = vsyncpa [#allocation5], 0
    %s8 = scalar_lea.sflag [#allocation5], 1
    %9 = vsyncpa %s8, 0
    loop: start=0, step=1, limit=4
    $region2: #{tpu_custom_call.1} parent=1 // loop_pre_header
      _
    $region3: #{tpu_custom_call.1} parent=1 // loop_header
      %s11 = sphi 0, %s15
      %p12 = scmp.ge.s32.totalorder %s11, 4
      %s18 = sphi 0, %s30
      %s19 = sphi 0, %s26
      %s20 = sphi 0, %s18
      %s21 = sphi 0, %s19
      %s22 = sphi 0, %s20
      %s23 = sphi 0, %s21
      %s35 = sphi 0, %s37
      %s38 = sphi 0, %s35
      %s39 = sphi 0, %s38
      %s55 = sphi 0, %s39
      %s63 = sphi 0, %s65
      %s66 = sphi 0, %s63
      %s67 = sphi 0, %s66
      %s83 = sphi 0, %s67
      %s89 = sphi 0, %s91
      %s92 = sphi 0, %s89
      %s93 = sphi 0, %s92
      %s109 = sphi 0, %s93
    $region4: #{tpu_custom_call.1} parent=1 // loop_header_branch
      %14 = sbr.rel (%p12) target = $region8
    $region5: #{tpu_custom_call.1} parent=1 // loop_body
      %s16 = ssub.s32 %s11, 1
      %s17 = ssub.s32 %s11, 2
      %s24 = sadd.s32 1, %s19
      %p25 = scmp.ge.s32.totalorder %s24, 1
      %s26 = scalar_select %p25, 0, %s24
      %s27 = sadd.s32 1, %s18
      %s28 = scalar_select %p25, %s27, %s18
      %p29 = scmp.ge.s32.totalorder %s28, 2
      %s30 = scalar_select %p29, 0, %s28
      %s31 = ssub.s32 %s18, %s30
      %s32 = ssub.s32 %s19, %s26
      %s33 = sor.u32 %s31, %s32
      %p34 = scmp.eq.s32.totalorder %s33, 0
      %s36 = sadd.s32 %s35, 1
      %s37 = scalar_select %p34, %s35, %s36
      %p40 = pneg %p34
      %p41 = scmp.eq.s32.totalorder %s11, 1
      %p42 = por %p40, %p41
      %p43 = scmp.ne.s32.totalorder %s35, %s38
      %p44 = scmp.eq.s32.totalorder %s11, 0
      %p45 = por %p43, %p44
      %p46 = scmp.ne.s32.totalorder %s35, %s38
      %p47 = scmp.eq.s32.totalorder %s16, 1
      %p48 = por %p46, %p47
      %p49 = scmp.ne.s32.totalorder %s38, %s39
      %p50 = scmp.eq.s32.totalorder %s16, 0
      %p51 = por %p49, %p50
      %p52 = scmp.ne.s32.totalorder %s38, %s39
      %p53 = scmp.eq.s32.totalorder %s17, 1
      %p54 = por %p52, %p53
      %p56 = scmp.ne.s32.totalorder %s39, %s55
      %p57 = scmp.eq.s32.totalorder %s17, 0
      %p58 = por %p56, %p57
      %s59 = ssub.s32 %s18, %s30
      %s60 = ssub.s32 %s19, %s26
      %s61 = sor.u32 %s59, %s60
      %p62 = scmp.eq.s32.totalorder %s61, 0
      %s64 = sadd.s32 %s63, 1
      %s65 = scalar_select %p62, %s63, %s64
      %p68 = pneg %p62
      %p69 = scmp.eq.s32.totalorder %s11, 1
      %p70 = por %p68, %p69
      %p71 = scmp.ne.s32.totalorder %s63, %s66
      %p72 = scmp.eq.s32.totalorder %s11, 0
      %p73 = por %p71, %p72
      %p74 = scmp.ne.s32.totalorder %s63, %s66
      %p75 = scmp.eq.s32.totalorder %s16, 1
      %p76 = por %p74, %p75
      %p77 = scmp.ne.s32.totalorder %s66, %s67
      %p78 = scmp.eq.s32.totalorder %s16, 0
      %p79 = por %p77, %p78
      %p80 = scmp.ne.s32.totalorder %s66, %s67
      %p81 = scmp.eq.s32.totalorder %s17, 1
      %p82 = por %p80, %p81
      %p84 = scmp.ne.s32.totalorder %s67, %s83
      %p85 = scmp.eq.s32.totalorder %s17, 0
      %p86 = por %p84, %p85
      %s87 = ssub.s32 %s18, %s30
      %p88 = scmp.eq.s32.totalorder %s87, 0
      %s90 = sadd.s32 %s89, 1
      %s91 = scalar_select %p88, %s89, %s90
      %p94 = pneg %p88
      %p95 = scmp.eq.s32.totalorder %s11, 1
      %p96 = por %p94, %p95
      %p97 = scmp.ne.s32.totalorder %s89, %s92
      %p98 = scmp.eq.s32.totalorder %s11, 0
      %p99 = por %p97, %p98
      %p100 = scmp.ne.s32.totalorder %s89, %s92
      %p101 = scmp.eq.s32.totalorder %s16, 1
      %p102 = por %p100, %p101
      %p103 = scmp.ne.s32.totalorder %s92, %s93
      %p104 = scmp.eq.s32.totalorder %s16, 0
      %p105 = por %p103, %p104
      %p106 = scmp.ne.s32.totalorder %s92, %s93
      %p107 = scmp.eq.s32.totalorder %s17, 1
      %p108 = por %p106, %p107
      %p110 = scmp.ne.s32.totalorder %s93, %s109
      %p111 = scmp.eq.s32.totalorder %s17, 0
      %p112 = por %p110, %p111
      %p113 = scmp.le.s32.totalorder 1, %s11
      %p114 = scmp.lt.s32.totalorder %s11, 3
      %p115 = pnand %p113, %p114
      %p116 = pneg %p115
      // Predicated region
      $region9: #{tpu_custom_call.1} parent=5 // pred_check
        _
      $region10: #{tpu_custom_call.1} parent=5 // pred_check_branch
        %118 = sbr.rel (%p115) target = $region12
      $region11: #{tpu_custom_call.1} parent=5 // pred_region
        %s119 = ssub.s32 %s11, 1
      $region12: #{tpu_custom_call.1} parent=5 // pred_fallthru
        _
      %p120 = scmp.lt.s32.totalorder %s11, 2
      // Predicated region
      $region13: #{tpu_custom_call.1} parent=5 // pred_check
        %p121 = pneg %p120
      $region14: #{tpu_custom_call.1} parent=5 // pred_check_branch
        %123 = sbr.rel (%p121) target = $region16
      $region15: #{tpu_custom_call.1} parent=5 // pred_region
        // Predicated region
        $region17: #{tpu_custom_call.1} parent=15 // pred_check
          %p124 = pneg %p45
        $region18: #{tpu_custom_call.1} parent=15 // pred_check_branch
          %126 = sbr.rel (%p124) target = $region20
        $region19: #{tpu_custom_call.1} parent=15 // pred_region
          %p127 = scmp.lt.s32.totalorder %s18, 1
          %s128 = scalar_select %p127, %s18, 1
          %p129 = scmp.lt.s32.totalorder %s19, 0
          %s130 = scalar_select %p129, %s19, 0
          %s131 = sadd.s32 %s130, %s128
          %s132 = smul.addr %s131, 8
          %s133 = scalar_lea.vmem %s0, %s132
        $region20: #{tpu_custom_call.1} parent=15 // pred_fallthru
          _
        // Predicated region
        $region21: #{tpu_custom_call.1} parent=15 // pred_check
          %p134 = pneg %p73
        $region22: #{tpu_custom_call.1} parent=15 // pred_check_branch
          %136 = sbr.rel (%p134) target = $region24
        $region23: #{tpu_custom_call.1} parent=15 // pred_region
          %p137 = scmp.lt.s32.totalorder %s18, 1
          %s138 = scalar_select %p137, %s18, 1
          %p139 = scmp.lt.s32.totalorder %s19, 0
          %s140 = scalar_select %p139, %s19, 0
          %s141 = sadd.s32 %s140, %s138
          %s142 = smul.addr %s141, 8
          %s143 = scalar_lea.vmem %s1, %s142
        $region24: #{tpu_custom_call.1} parent=15 // pred_fallthru
          _
      $region16: #{tpu_custom_call.1} parent=5 // pred_fallthru
        _
      %p144 = scmp.le.s32.totalorder 1, %s11
      %p145 = scmp.lt.s32.totalorder %s11, 3
      %p146 = pnand %p144, %p145
      %p147 = pneg %p146
      // Predicated region
      $region25: #{tpu_custom_call.1} parent=5 // pred_check
        _
      $region26: #{tpu_custom_call.1} parent=5 // pred_check_branch
        %149 = sbr.rel (%p146) target = $region28
      $region27: #{tpu_custom_call.1} parent=5 // pred_region
        %s150 = ssub.s32 %s11, 1
        %p151 = scmp.lt.s32.totalorder %s20, 1
        %s152 = scalar_select %p151, %s20, 1
        %p153 = scmp.lt.s32.totalorder %s21, 0
        %s154 = scalar_select %p153, %s21, 0
        %s155 = sadd.s32 %s154, %s152
        %s156 = smul.addr %s155, 8
        %s157 = scalar_lea.vmem %s0, %s156
        %p158 = pneg %p51
        %p159 = pneg %p48
        %p160 = scmp.lt.s32.totalorder %s20, 1
        %s161 = scalar_select %p160, %s20, 1
        %p162 = scmp.lt.s32.totalorder %s21, 0
        %s163 = scalar_select %p162, %s21, 0
        %s164 = sadd.s32 %s163, %s161
        %s165 = smul.addr %s164, 8
        %s166 = scalar_lea.vmem %s1, %s165
        %p167 = pneg %p79
        %p168 = pneg %p76
        %p169 = pneg %p105
        %p170 = pneg %p102
        %s171 = sand.u32 %s92, 1
        %s172 = scalar_lea.sflag [#allocation5], %s171
        %s173 = sand.u32 %s92, 1
        %s174 = smul.addr %s173, 16
        %s175 = scalar_lea.vmem [#allocation4], %s174
        %p176 = scmp.lt.s32.totalorder %s20, 1
        %s177 = scalar_select %p176, %s20, 1
        %p178 = scmp.lt.s32.totalorder %s21, 0
        %s179 = scalar_select %p178, %s21, 0
        %s180 = sadd.s32 %s179, %s177
        %s181 = smul.addr %s180, 8
        %s182 = scalar_lea.vmem %s0, %s181
        %p183 = scmp.lt.s32.totalorder %s20, 1
        %s184 = scalar_select %p183, %s20, 1
        %p185 = scmp.lt.s32.totalorder %s21, 0
        %s186 = scalar_select %p185, %s21, 0
        %s187 = sadd.s32 %s186, %s184
        %s188 = smul.addr %s187, 8
        %s189 = scalar_lea.vmem %s1, %s188
        %p190 = scmp.eq.s32.totalorder %s21, 0
        // Predicated region
        $region29: #{tpu_custom_call.1} parent=27 // pred_check
          %p191 = pneg %p190
        $region30: #{tpu_custom_call.1} parent=27 // pred_check_branch
          %193 = sbr.rel (%p191) target = $region32
        $region31: #{tpu_custom_call.1} parent=27 // pred_region
          %194 = vst [vmem:[#allocation2] sm:$0xff] 0.0
          %195 = vst [vmem:[#allocation2 + $0x8] sm:$0xff] 0.0
          %196 = vst [vmem:[#allocation3] sm:$0x1] 0.0
        $region32: #{tpu_custom_call.1} parent=27 // pred_fallthru
          _
        %v197 = vld [vmem:[%s182] sm:$0xff]
        %v198 = vld [vmem:[%s189] sm:$0xff]
        %v199 = vmul.f32 %v198, 3.9894228
        %201 = vset.pattern.permute.xlu0 0
        %202 = vperm.xlu0 %201, %v199
        %v203 = vpop.permute.xlu0 %202
        %v205 = vmul.f32 %v197, %v197
        %v206 = vmul.f32 %v205, -50.0
        %v207 = vmul.f32 %v206, 1.442695
        %v208 = vpow.pop %v207
        %v209 = vmul.f32 %v203, %v208
        %v210 = vrot.slane %v209, 4
        %v211 = vadd.f32 %v209, %v210
        %v212 = vrot.slane %v211, 2
        %v213 = vadd.f32 %v211, %v212
        %v214 = vrot.slane %v213, 1
        %v215 = vadd.f32 %v213, %v214
        %v216 = vsub.f32 %v197, 0.06666667
        %v217 = vmul.f32 %v216, %v216
        %v218 = vmul.f32 %v217, -50.0
        %v219 = vmul.f32 %v218, 1.442695
        %v220 = vpow.pop %v219
        %v221 = vmul.f32 %v203, %v220
        %v222 = vrot.slane %v221, 4
        %v223 = vadd.f32 %v221, %v222
        %v224 = vrot.slane %v223, 2
        %v225 = vadd.f32 %v223, %v224
        %v226 = vrot.slane %v225, 1
        %v227 = vadd.f32 %v225, %v226
        %v228 = vadd.f32 %v215, %v227
        %v229 = vsub.f32 %v197, 0.13333334
        %v230 = vmul.f32 %v229, %v229
        %v231 = vmul.f32 %v230, -50.0
        %v232 = vmul.f32 %v231, 1.442695
        %v233 = vpow.pop %v232
        %v234 = vmul.f32 %v203, %v233
        %v235 = vrot.slane %v234, 4
        %v236 = vadd.f32 %v234, %v235
        %v237 = vrot.slane %v236, 2
        %v238 = vadd.f32 %v236, %v237
        %v239 = vrot.slane %v238, 1
        %v240 = vadd.f32 %v238, %v239
        %v241 = vadd.f32 %v228, %v240
        %v242 = vsub.f32 %v197, 0.2
        %v243 = vmul.f32 %v242, %v242
        %v244 = vmul.f32 %v243, -50.0
        %v245 = vmul.f32 %v244, 1.442695
        %v246 = vpow.pop %v245
        %v247 = vmul.f32 %v203, %v246
        %v248 = vrot.slane %v247, 4
        %v249 = vadd.f32 %v247, %v248
        %v250 = vrot.slane %v249, 2
        %v251 = vadd.f32 %v249, %v250
        %v252 = vrot.slane %v251, 1
        %v253 = vadd.f32 %v251, %v252
        %v254 = vadd.f32 %v241, %v253
        %v255 = vsub.f32 %v197, 0.26666668
        %v256 = vmul.f32 %v255, %v255
        %v257 = vmul.f32 %v256, -50.0
        %v258 = vmul.f32 %v257, 1.442695
        %v259 = vpow.pop %v258
        %v260 = vmul.f32 %v203, %v259
        %v261 = vrot.slane %v260, 4
        %v262 = vadd.f32 %v260, %v261
        %v263 = vrot.slane %v262, 2
        %v264 = vadd.f32 %v262, %v263
        %v265 = vrot.slane %v264, 1
        %v266 = vadd.f32 %v264, %v265
        %v267 = vadd.f32 %v254, %v266
        %v268 = vsub.f32 %v197, 0.33333334
        %v269 = vmul.f32 %v268, %v268
        %v270 = vmul.f32 %v269, -50.0
        %v271 = vmul.f32 %v270, 1.442695
        %v272 = vpow.pop %v271
        %v273 = vmul.f32 %v203, %v272
        %v274 = vrot.slane %v273, 4
        %v275 = vadd.f32 %v273, %v274
        %v276 = vrot.slane %v275, 2
        %v277 = vadd.f32 %v275, %v276
        %v278 = vrot.slane %v277, 1
        %v279 = vadd.f32 %v277, %v278
        %v280 = vadd.f32 %v267, %v279
        %v281 = vsub.f32 %v197, 0.4
        %v282 = vmul.f32 %v281, %v281
        %v283 = vmul.f32 %v282, -50.0
        %v284 = vmul.f32 %v283, 1.442695
        %v285 = vpow.pop %v284
        %v286 = vmul.f32 %v203, %v285
        %v287 = vrot.slane %v286, 4
        %v288 = vadd.f32 %v286, %v287
        %v289 = vrot.slane %v288, 2
        %v290 = vadd.f32 %v288, %v289
        %v291 = vrot.slane %v290, 1
        %v292 = vadd.f32 %v290, %v291
        %v293 = vadd.f32 %v280, %v292
        %v294 = vsub.f32 %v197, 0.46666667
        %v295 = vmul.f32 %v294, %v294
        %v296 = vmul.f32 %v295, -50.0
        %v297 = vmul.f32 %v296, 1.442695
        %v298 = vpow.pop %v297
        %v299 = vmul.f32 %v203, %v298
        %v300 = vrot.slane %v299, 4
        %v301 = vadd.f32 %v299, %v300
        %v302 = vrot.slane %v301, 2
        %v303 = vadd.f32 %v301, %v302
        %v304 = vrot.slane %v303, 1
        %v305 = vadd.f32 %v303, %v304
        %v306 = vadd.f32 %v293, %v305
        %v307 = vsub.f32 %v197, 0.53333336
        %v308 = vmul.f32 %v307, %v307
        %v309 = vmul.f32 %v308, -50.0
        %v310 = vmul.f32 %v309, 1.442695
        %v311 = vpow.pop %v310
        %v312 = vmul.f32 %v203, %v311
        %v313 = vrot.slane %v312, 4
        %v314 = vadd.f32 %v312, %v313
        %v315 = vrot.slane %v314, 2
        %v316 = vadd.f32 %v314, %v315
        %v317 = vrot.slane %v316, 1
        %v318 = vadd.f32 %v316, %v317
        %v319 = vadd.f32 %v306, %v318
        %v320 = vsub.f32 %v197, 0.6
        %v321 = vmul.f32 %v320, %v320
        %v322 = vmul.f32 %v321, -50.0
        %v323 = vmul.f32 %v322, 1.442695
        %v324 = vpow.pop %v323
        %v325 = vmul.f32 %v203, %v324
        %v326 = vrot.slane %v325, 4
        %v327 = vadd.f32 %v325, %v326
        %v328 = vrot.slane %v327, 2
        %v329 = vadd.f32 %v327, %v328
        %v330 = vrot.slane %v329, 1
        %v331 = vadd.f32 %v329, %v330
        %v332 = vadd.f32 %v319, %v331
        %v333 = vsub.f32 %v197, 0.6666667
        %v334 = vmul.f32 %v333, %v333
        %v335 = vmul.f32 %v334, -50.0
        %v336 = vmul.f32 %v335, 1.442695
        %v337 = vpow.pop %v336
        %v338 = vmul.f32 %v203, %v337
        %v339 = vrot.slane %v338, 4
        %v340 = vadd.f32 %v338, %v339
        %v341 = vrot.slane %v340, 2
        %v342 = vadd.f32 %v340, %v341
        %v343 = vrot.slane %v342, 1
        %v344 = vadd.f32 %v342, %v343
        %v345 = vadd.f32 %v332, %v344
        %v346 = vsub.f32 %v197, 0.73333335
        %v347 = vmul.f32 %v346, %v346
        %v348 = vmul.f32 %v347, -50.0
        %v349 = vmul.f32 %v348, 1.442695
        %v350 = vpow.pop %v349
        %v351 = vmul.f32 %v203, %v350
        %v352 = vrot.slane %v351, 4
        %v353 = vadd.f32 %v351, %v352
        %v354 = vrot.slane %v353, 2
        %v355 = vadd.f32 %v353, %v354
        %v356 = vrot.slane %v355, 1
        %v357 = vadd.f32 %v355, %v356
        %v358 = vadd.f32 %v345, %v357
        %v359 = vsub.f32 %v197, 0.8
        %v360 = vmul.f32 %v359, %v359
        %v361 = vmul.f32 %v360, -50.0
        %v362 = vmul.f32 %v361, 1.442695
        %v363 = vpow.pop %v362
        %v364 = vmul.f32 %v203, %v363
        %v365 = vrot.slane %v364, 4
        %v366 = vadd.f32 %v364, %v365
        %v367 = vrot.slane %v366, 2
        %v368 = vadd.f32 %v366, %v367
        %v369 = vrot.slane %v368, 1
        %v370 = vadd.f32 %v368, %v369
        %v371 = vadd.f32 %v358, %v370
        %v372 = vsub.f32 %v197, 0.8666667
        %v373 = vmul.f32 %v372, %v372
        %v374 = vmul.f32 %v373, -50.0
        %v375 = vmul.f32 %v374, 1.442695
        %v376 = vpow.pop %v375
        %v377 = vmul.f32 %v203, %v376
        %v378 = vrot.slane %v377, 4
        %v379 = vadd.f32 %v377, %v378
        %v380 = vrot.slane %v379, 2
        %v381 = vadd.f32 %v379, %v380
        %v382 = vrot.slane %v381, 1
        %v383 = vadd.f32 %v381, %v382
        %v384 = vadd.f32 %v371, %v383
        %v385 = vsub.f32 %v197, 0.93333334
        %v386 = vmul.f32 %v385, %v385
        %v387 = vmul.f32 %v386, -50.0
        %v388 = vmul.f32 %v387, 1.442695
        %v389 = vpow.pop %v388
        %v390 = vmul.f32 %v203, %v389
        %v391 = vrot.slane %v390, 4
        %v392 = vadd.f32 %v390, %v391
        %v393 = vrot.slane %v392, 2
        %v394 = vadd.f32 %v392, %v393
        %v395 = vrot.slane %v394, 1
        %v396 = vadd.f32 %v394, %v395
        %v397 = vadd.f32 %v384, %v396
        %v398 = vsub.f32 %v197, 1.0
        %v399 = vmul.f32 %v398, %v398
        %v400 = vmul.f32 %v399, -50.0
        %v401 = vmul.f32 %v400, 1.442695
        %v402 = vpow.pop %v401
        %v403 = vmul.f32 %v203, %v402
        %v404 = vrot.slane %v403, 4
        %v405 = vadd.f32 %v403, %v404
        %v406 = vrot.slane %v405, 2
        %v407 = vadd.f32 %v405, %v406
        %v408 = vrot.slane %v407, 1
        %v409 = vadd.f32 %v407, %v408
        %v410 = vadd.f32 %v397, %v409
        %vm411 = vcmask 1040384
        %v412 = vsel %vm411, %v215, %v227
        %vm413 = vcmask 1041408
        %v414 = vsel %vm413, %v412, %v240
        %vm415 = vcmask 1042432
        %v416 = vsel %vm415, %v414, %v253
        %vm417 = vcmask 1043456
        %v418 = vsel %vm417, %v416, %v266
        %vm419 = vcmask 1044480
        %v420 = vsel %vm419, %v418, %v279
        %vm421 = vcmask 1045504
        %v422 = vsel %vm421, %v420, %v292
        %vm423 = vcmask 1046528
        %v424 = vsel %vm423, %v422, %v305
        %v425 = vsel %vm411, %v318, %v331
        %v426 = vsel %vm413, %v425, %v344
        %v427 = vsel %vm415, %v426, %v357
        %v428 = vsel %vm417, %v427, %v370
        %v429 = vsel %vm419, %v428, %v383
        %v430 = vsel %vm421, %v429, %v396
        %v431 = vsel %vm423, %v430, %v409
        %v432 = vld [vmem:[#allocation2] sm:$0xff]
        %v433 = vld [vmem:[#allocation2 + $0x8] sm:$0xff]
        %v434 = vadd.f32 %v432, %v424
        %v435 = vadd.f32 %v433, %v431
        %436 = vst [vmem:[#allocation2] sm:$0xff] %v434
        %437 = vst [vmem:[#allocation2 + $0x8] sm:$0xff] %v435
        %v438 = vld [vmem:[#allocation3] sm:$0x1]
        %v439 = vadd.f32 %v438, %v410
        %440 = vst [vmem:[#allocation3] sm:$0x1] %v439
        // Predicated region
        $region33: #{tpu_custom_call.1} parent=27 // pred_check
          %p441 = pneg %p190
        $region34: #{tpu_custom_call.1} parent=27 // pred_check_branch
          %443 = sbr.rel (%p441) target = $region36
        $region35: #{tpu_custom_call.1} parent=27 // pred_region
          %v444 = vld [vmem:[#allocation3] sm:$0x1]
          %v445 = vrcp.pop %v444
          %v446 = vld [vmem:[#allocation2] sm:$0xff]
          %v447 = vld [vmem:[#allocation2 + $0x8] sm:$0xff]
          %v449 = vlaneseq
          %v450 = vshrl.u32 %v449, 7
          %v451 = vsub.s32 0, %v450
          %v452 = vrot.slane %v445, %v451
          %v454 = vmul.f32 %v446, %v452
          %v455 = vmul.f32 %v447, %v452
          %456 = vst [vmem:[%s175] sm:$0xff] %v454
          %457 = vst [vmem:[%s175 + $0x8] sm:$0xff] %v455
        $region36: #{tpu_custom_call.1} parent=27 // pred_fallthru
          _
        %s458 = sand.u32 %s92, 1
        %s459 = scalar_lea.sflag [#allocation5], %s458
        %s460 = sand.u32 %s92, 1
        %s461 = smul.addr %s460, 16
        %s462 = scalar_lea.vmem [#allocation4], %s461
        // Predicated region
        $region37: #{tpu_custom_call.1} parent=27 // pred_check
          %p463 = pneg %p102
        $region38: #{tpu_custom_call.1} parent=27 // pred_check_branch
          %465 = sbr.rel (%p463) target = $region40
        $region39: #{tpu_custom_call.1} parent=27 // pred_region
          %s467 = ssub.s32 256, 256
          %468 = vsyncadd %s459, %s467
          %s469 = smul.addr %s20, 2
          %s470 = smul.addr %s469, 128
          %s471 = scalar_lea.hbm %s2, %s470
          %s472 = sshll.u32 %s462, 4
          %s473 = int_to_ptr.vmem [resolvable:$true] %s472
          %478 = dma.vmem_to_hbm [thread:$0]  %s473, 256, %s471, %s459, 128, 128, 8
        $region40: #{tpu_custom_call.1} parent=27 // pred_fallthru
          _
      $region28: #{tpu_custom_call.1} parent=5 // pred_fallthru
        _
      %p479 = scmp.le.s32.totalorder 2, %s11
      // Predicated region
      $region41: #{tpu_custom_call.1} parent=5 // pred_check
        %p480 = pneg %p479
      $region42: #{tpu_custom_call.1} parent=5 // pred_check_branch
        %482 = sbr.rel (%p480) target = $region44
      $region43: #{tpu_custom_call.1} parent=5 // pred_region
        %s483 = ssub.s32 %s11, 2
        // Predicated region
        $region45: #{tpu_custom_call.1} parent=43 // pred_check
          %p484 = pneg %p108
        $region46: #{tpu_custom_call.1} parent=43 // pred_check_branch
          %486 = sbr.rel (%p484) target = $region48
        $region47: #{tpu_custom_call.1} parent=43 // pred_region
          %s487 = sand.u32 %s93, 1
          %s488 = scalar_lea.sflag [#allocation5], %s487
          %s489 = sand.u32 %s93, 1
          %s490 = smul.addr %s489, 16
          %s491 = scalar_lea.vmem [#allocation4], %s490
          %492 = dma.done %s488, 256
        $region48: #{tpu_custom_call.1} parent=43 // pred_fallthru
          _
      $region44: #{tpu_custom_call.1} parent=5 // pred_fallthru
        _
    $region6: #{tpu_custom_call.1} parent=1 // loop_footer
      %s15 = sadd.s32 1, %s11
    $region7: #{tpu_custom_call.1} parent=1 // loop_footer_branch
      %10 = sbr.rel target = $region3
    $region8: #{tpu_custom_call.1} parent=1 // loop_exit
      _
    %493 = vsyncpa [#allocation5], 1
    %s494 = scalar_lea.sflag [#allocation5], 1
    %495 = vsyncpa %s494, 1

</llo_original>
